<compile_context>
chip_gen: v7x
topology: tpu7x:2x2x1
jax: 0.10.0
libtpu: 0.0.40
codegen_flags: <defaults>
</compile_context>

<pallas_src>
import functools

import jax
import jax.numpy as jnp
from jax.experimental import pallas as pl
from jax.experimental.pallas import tpu as pltpu

_LANE = 128
_COL_CANDIDATES = (4096, 2048, 1024, 512, 256, 128)


def _cdiv(a, b):
    return -(-a // b)


@functools.lru_cache(maxsize=1)
def _num_tensorcores():
    """TensorCores per chip (v7x: 2, v5e/v6e: 1).  Conservative: default 1."""
    get_info = getattr(pltpu, "get_tpu_info", None)
    if get_info is None:
        return 1
    try:
        info = get_info()
    except Exception:
        return 1
    for name in ("num_tensorcores", "tensorcore_count", "num_cores_per_chip",
                 "cores_per_chip", "num_cores", "core_count"):
        v = getattr(info, name, None)
        if isinstance(v, int) and 1 <= v <= 8:
            return v
    return 1


def _pick_cols(n, sub):
    """Largest lane-dense (multiple-of-128) width that divides n.

    First pass prefers widths whose row count lands on a packed-sublane
    multiple; second pass accepts any divisor.  Returns 0 if none exists.
    """
    for c in _COL_CANDIDATES:
        if n % c == 0 and (n // c) % sub == 0:
            return c
    for c in _COL_CANDIDATES:
        if n % c == 0:
            return c
    return 0


def _relu_kernel(x_ref, o_ref):
    # One fused load -> max -> store.  No dtype upcast (ReLU is exact in any
    # dtype; extra casts would only add VPU work, worst on v5e's f32-only VPU).
    o_ref[...] = jnp.maximum(x_ref[...], 0)


def relu_pallas(x, *, max_block_bytes=4 << 20, min_pallas_bytes=256 << 10,
                donate=False):
    """Elementwise ReLU over an arbitrary-shaped tensor via a lane-dense slab."""
    orig_shape, dtype = x.shape, x.dtype
    n = x.size
    if n == 0:
        return x
    itemsize = dtype.itemsize

    # Tiny tensors: pallas_call fixed cost dominates; a plain XLA maximum is
    # strictly faster (and still exactly 1 HBM read + 1 HBM write).
    if n * itemsize < min_pallas_bytes:
        return jnp.maximum(x, 0)

    # Packed-sublane row multiple: 8 for f32, 16 for bf16, 32 for int8/fp8.
    sub = 8 * max(1, 4 // itemsize)

    cols = _pick_cols(n, sub)
    if cols == 0:
        # Element count is not a multiple of 128: no pad-free lane-dense layout.
        # TODO(synk): could run a 128-aligned head through Pallas plus a tiny
        # XLA tail, but stitching them back costs a full extra copy, so the
        # plain fused XLA maximum (1 read + 1 write) wins here.
        return jnp.maximum(x, 0)
    rows = n // cols

    # Row block: packed-sublane multiple, tile <= max_block_bytes so the
    # double-buffered in+out tiles (4x tile) stay <= ~16 MiB on every chip.
    budget_rows = max(sub, (max_block_bytes // (cols * itemsize)) // sub * sub)
    if rows <= budget_rows:
        row_block = rows            # single block (full-dim row count is legal)
    else:
        row_block = budget_rows
    grid_n = _cdiv(rows, row_block)

    # Multi-TensorCore chips (v7x): keep the block count a multiple of the core
    # count so the "parallel" grid axis splits evenly across cores.  On 1-TC
    # v5e/v6e this is a no-op: no forced split, no extra grid steps, no padding
    # (a non-dividing last block is simply masked).
    # (If "parallel" does not trigger 2-TC partitioning on a given toolchain,
    #  pltpu.CORE_PARALLEL / pl.core_map is the heavier-weight alternative.)
    num_cores = _num_tensorcores()
    if num_cores > 1 and rows > sub:
        target_blocks = max(num_cores, _cdiv(grid_n, num_cores) * num_cores)
        balanced = max(sub, _cdiv(_cdiv(rows, target_blocks), sub) * sub)
        row_block = min(row_block, balanced)
        grid_n = _cdiv(rows, row_block)

    x2d = x.reshape(rows, cols)      # pure metadata reshape: no copy, no pad

    out2d = pl.pallas_call(
        _relu_kernel,
        out_shape=jax.ShapeDtypeStruct((rows, cols), dtype),
        grid=(grid_n,),
        in_specs=[pl.BlockSpec((row_block, cols), lambda i: (i, 0))],
        out_specs=pl.BlockSpec((row_block, cols), lambda i: (i, 0)),
        input_output_aliases=({0: 0} if donate else {}),
        compiler_params=pltpu.CompilerParams(
            dimension_semantics=("parallel",),
            vmem_limit_bytes=32 << 20,
        ),
    )(x2d)

    return out2d.reshape(orig_shape)  # pure metadata reshape: no copy, no slice


if __name__ == "__main__":
    key = jax.random.PRNGKey(0)
    k0, k1, k2, k3 = jax.random.split(key, 4)

    # 1) The module's example input (tiny: takes the fused XLA fast path).
    x = jax.random.normal(k0, (2, 4, 16, 16), dtype=jnp.float32)
    ref = jnp.maximum(x, 0.0)
    out = jax.block_until_ready(relu_pallas(x))
    assert out.shape == x.shape and out.dtype == x.dtype
    assert jnp.array_equal(out, ref)

    # 2) Same small input forced through the Pallas kernel (lane-dense slab,
    #    zero padding, zero extra copies).
    out_p = jax.block_until_ready(relu_pallas(x, min_pallas_bytes=0))
    assert out_p.shape == x.shape and out_p.dtype == x.dtype
    assert jnp.array_equal(out_p, ref)

    # 3) Larger f32 tensor through the default Pallas path (pad-free reshape).
    xl = jax.random.normal(k1, (2, 4, 128, 128), dtype=jnp.float32)
    ref_l = jnp.maximum(xl, 0.0)
    out_l = jax.block_until_ready(relu_pallas(xl))
    assert jnp.array_equal(out_l, ref_l)

    # 4) f32 tensor whose row count does not divide the block: exercises the
    #    cdiv grid with a masked boundary block (no padding copies).
    xm = jax.random.normal(k2, (5, 7, 8, 128), dtype=jnp.float32)
    out_m = jax.block_until_ready(
        relu_pallas(xm, min_pallas_bytes=0, max_block_bytes=64 << 10))
    assert jnp.array_equal(out_m, jnp.maximum(xm, 0.0))

    # 5) bf16 multi-block path (dtype-aware 16-row sublane alignment).
    xb = jax.random.normal(k3, (30, 128, 128), dtype=jnp.bfloat16)
    out_b = jax.block_until_ready(
        relu_pallas(xb, min_pallas_bytes=0, max_block_bytes=64 << 10))
    assert out_b.shape == xb.shape and out_b.dtype == xb.dtype
    assert jnp.array_equal(out_b.astype(jnp.float32),
                           jnp.maximum(xb, 0).astype(jnp.float32))

    # 6) Ragged total size (not a multiple of 128): clean XLA fallback.
    xr = jax.random.normal(k0, (3, 5, 7, 11), dtype=jnp.bfloat16)
    out_r = jax.block_until_ready(relu_pallas(xr, min_pallas_bytes=0))
    assert out_r.shape == xr.shape and out_r.dtype == xr.dtype
    assert jnp.array_equal(out_r.astype(jnp.float32),
                           jnp.maximum(xr, 0).astype(jnp.float32))

    # 7) input_output_aliases path (opt-in `donate=True`).
    out_d = jax.block_until_ready(relu_pallas(xl, donate=True, min_pallas_bytes=0))
    assert jnp.array_equal(out_d, ref_l)

    print("KERNEL_OK")
</pallas_src>

<mosaic_0001>
module attributes {stable_mosaic.version = 11 : i64} {
  func.func @_relu_kernel(%arg0: i32, %arg1: memref<8x256xf32, #tpu.memory_space<vmem>>, %arg2: memref<8x256xf32, #tpu.memory_space<vmem>>) attributes {dimension_semantics = [#tpu.dimension_semantics<parallel>], iteration_bounds = array<i64: 1>, scalar_prefetch = 0 : i64, scratch_operands = 0 : i64, tpu.core_type = #tpu.core_type<tc>, window_params = [{transform_indices = @transform_0, window_bounds = array<i64: 8, 256>}, {transform_indices = @transform_1, window_bounds = array<i64: 8, 256>}]} {
    %c0 = arith.constant 0 : index
    %c0_0 = arith.constant 0 : index
    %0 = vector.load %arg1[%c0, %c0_0] : memref<8x256xf32, #tpu.memory_space<vmem>>, vector<8x256xf32>
    %cst = arith.constant 0.000000e+00 : f32
    %1 = vector.broadcast %cst : f32 to vector<8x256xf32>
    %2 = arith.maximumf %0, %1 : vector<8x256xf32>
    %c0_1 = arith.constant 0 : index
    %c0_2 = arith.constant 0 : index
    %3 = vector.load %arg2[%c0_1, %c0_2] : memref<8x256xf32, #tpu.memory_space<vmem>>, vector<8x256xf32>
    tpu.vector_store %arg2[%c0_1, %c0_2], %2 {strides = array<i32>} : memref<8x256xf32, #tpu.memory_space<vmem>>, vector<8x256xf32>,
    return
  }
  func.func @transform_0(%arg0: i32) -> (i32, i32) {
    %c0_i32 = arith.constant 0 : i32
    %c0_i32_0 = arith.constant 0 : i32
    return %arg0, %c0_i32 : i32, i32
  }
  func.func @transform_1(%arg0: i32) -> (i32, i32) {
    %c0_i32 = arith.constant 0 : i32
    %c0_i32_0 = arith.constant 0 : i32
    return %arg0, %c0_i32 : i32, i32
  }
}

</mosaic_0001>

<llo_original>
// kernel: tpu_custom_call.1
$region0: #{tpu_custom_call.1}
  #allocation0 [shape = 'u32[]', space=smem, size = 0x4, offset = 0x4, fixed_abs, tag = 'smem constant byte address 0x4 - core index']
  #allocation1 [shape = 'u32[144,128]{1,0:T(1,128)}', space=vmem, size = 0x12000, scoped, tag = 'internal scratch']
  %s0 = inlined_call_operand.hbm [shape: f32[8,256], index: 0, kind: input, shape index: {}]
  %s1 = inlined_call_operand.hbm [shape: f32[8,256], index: 1, kind: output, shape index: {}]
  %s2 = sld [smem:[#allocation0]]
  $region18: #{tpu_custom_call.1} parent=0
    _
  %s4 = ssub.s32 1, %s2
  %s5 = scalar_select 0, %s4, %s2
  $region1: #{tpu_custom_call.1} parent=0
    #allocation2 [shape = 'u8[8192]{0}', space=vmem, size = 0x2000, scoped, tag = 'input window, operand 0, single buffered']
    #allocation3 [shape = 's32[1]{0}', space=sflag, size = 0x4, scoped, tag = 'scoped memory for tpu_custom_call.1']
    #allocation4 [shape = 's32[1]{0}', space=sflag, size = 0x4, scoped, tag = 'scoped memory for tpu_custom_call.1']
    #allocation5 [shape = 'u8[8192]{0}', space=vmem, size = 0x2000, scoped, tag = 'output window, operand 0, single buffered']
    %6 = vsyncpa [#allocation3], 0
    %7 = vsyncpa [#allocation4], 0
    // Predicated region
    $region2: #{tpu_custom_call.1} parent=1 // pred_check
      _
    $region3: #{tpu_custom_call.1} parent=1 // pred_check_branch
      %9 = sbr.rel (0) target = $region5
    $region4: #{tpu_custom_call.1} parent=1 // pred_region
      %s11 = ssub.s32 256, 256
      %12 = vsyncadd [#allocation3], %s11
      %s14 = sshll.u32 [#allocation2], 4
      %s15 = int_to_ptr.vmem [resolvable:$true] %s14
      %17 = dma.hbm_to_vmem [thread:$0]  %s0, 256, %s15, [#allocation3]
    $region5: #{tpu_custom_call.1} parent=1 // pred_fallthru
      _
    // Predicated region
    $region6: #{tpu_custom_call.1} parent=1 // pred_check
      _
    $region7: #{tpu_custom_call.1} parent=1 // pred_check_branch
      %19 = sbr.rel (0) target = $region9
    $region8: #{tpu_custom_call.1} parent=1 // pred_region
      %20 = dma.done [#allocation3], 256
    $region9: #{tpu_custom_call.1} parent=1 // pred_fallthru
      _
    %v21 = vld [vmem:[#allocation2] sm:$0xff]
    %v22 = vld [vmem:[#allocation2 + $0x8] sm:$0xff]
    %v23 = vmax.f32 %v21, 0.0
    %v24 = vmax.f32 %v22, 0.0
    %25 = vst [vmem:[#allocation5] sm:$0xff] %v23
    %26 = vst [vmem:[#allocation5 + $0x8] sm:$0xff] %v24
    // Predicated region
    $region10: #{tpu_custom_call.1} parent=1 // pred_check
      _
    $region11: #{tpu_custom_call.1} parent=1 // pred_check_branch
      %28 = sbr.rel (0) target = $region13
    $region12: #{tpu_custom_call.1} parent=1 // pred_region
      %s30 = ssub.s32 256, 256
      %31 = vsyncadd [#allocation4], %s30
      %s33 = sshll.u32 [#allocation5], 4
      %s34 = int_to_ptr.vmem [resolvable:$true] %s33
      %36 = dma.vmem_to_hbm [thread:$0]  %s34, 256, %s1, [#allocation4]
    $region13: #{tpu_custom_call.1} parent=1 // pred_fallthru
      _
    // Predicated region
    $region14: #{tpu_custom_call.1} parent=1 // pred_check
      _
    $region15: #{tpu_custom_call.1} parent=1 // pred_check_branch
      %38 = sbr.rel (0) target = $region17
    $region16: #{tpu_custom_call.1} parent=1 // pred_region
      %39 = dma.done [#allocation4], 256
    $region17: #{tpu_custom_call.1} parent=1 // pred_fallthru
      _
    %40 = vsyncpa [#allocation3], 1
    %41 = vsyncpa [#allocation4], 1

</llo_original>
